<compile_context>
chip_gen: v7x
topology: tpu7x:2x2x1
jax: 0.10.0
libtpu: 0.0.40
codegen_flags: <defaults>
</compile_context>

<pallas_src>
import functools

import jax
import jax.numpy as jnp
from jax.experimental import pallas as pl
from jax.experimental.pallas import tpu as pltpu


def _round_up(x, m):
    return ((x + m - 1) // m) * m


def _vmem_capacity_bytes():
    """Physical VMEM of the current TPU; conservative 64 MiB fallback (v7x)."""
    try:
        info = pltpu.get_tpu_info()
        cap = getattr(info, "vmem_capacity_bytes", None)
        if cap:
            return int(cap)
    except Exception:
        pass
    return 64 << 20


# ---------------------------------------------------------------------------
# Kernels
# ---------------------------------------------------------------------------
def _ffn_kernel_out_accum(x_ref, w1_ref, b1_ref, w2_ref, b2_ref, o_ref):
    """f32 output: accumulate directly into the resident output block."""
    k = pl.program_id(1)

    @pl.when(k == 0)
    def _init():
        o_ref[...] = jnp.zeros_like(o_ref)

    h = jnp.dot(x_ref[...], w1_ref[...], preferred_element_type=jnp.float32)
    h = jnp.maximum(h + b1_ref[...], 0.0)
    # dropout: identity (eval mode)
    o_ref[...] += jnp.dot(h.astype(w2_ref.dtype), w2_ref[...],
                          preferred_element_type=jnp.float32)

    @pl.when(k == pl.num_programs(1) - 1)
    def _finalize():
        o_ref[...] += b2_ref[...]


def _ffn_kernel_scratch(x_ref, w1_ref, b1_ref, w2_ref, b2_ref, o_ref, acc_ref):
    """Non-f32 output: accumulate in an f32 VMEM scratch, cast at finalize."""
    k = pl.program_id(1)

    @pl.when(k == 0)
    def _init():
        acc_ref[...] = jnp.zeros_like(acc_ref)

    h = jnp.dot(x_ref[...], w1_ref[...], preferred_element_type=jnp.float32)
    h = jnp.maximum(h + b1_ref[...], 0.0)
    # dropout: identity (eval mode)
    acc_ref[...] += jnp.dot(h.astype(w2_ref.dtype), w2_ref[...],
                            preferred_element_type=jnp.float32)

    @pl.when(k == pl.num_programs(1) - 1)
    def _finalize():
        o_ref[...] = (acc_ref[...] + b2_ref[...]).astype(o_ref.dtype)


# ---------------------------------------------------------------------------
# Parameter preparation (one-time pad + bf16 cast; NOT per call)
# ---------------------------------------------------------------------------
def prepare_ffn_params(w1, b1, w2, b2):
    """Pad d_model/d_ff to 128 alignment and cast weights to bf16, once."""
    d_model, d_ff = w1.shape
    d_model_p = _round_up(d_model, 128)
    d_ff_p = _round_up(d_ff, 128)
    pm, pf = d_model_p - d_model, d_ff_p - d_ff

    w1_p = w1 if (pm == 0 and pf == 0) else jnp.pad(w1, ((0, pm), (0, pf)))
    w2_p = w2 if (pm == 0 and pf == 0) else jnp.pad(w2, ((0, pf), (0, pm)))
    b1_p = b1.reshape(1, -1)
    b2_p = b2.reshape(1, -1)
    if pf:
        b1_p = jnp.pad(b1_p, ((0, 0), (0, pf)))
    if pm:
        b2_p = jnp.pad(b2_p, ((0, 0), (0, pm)))

    return (w1_p.astype(jnp.bfloat16), b1_p.astype(jnp.float32),
            w2_p.astype(jnp.bfloat16), b2_p.astype(jnp.float32))


# ---------------------------------------------------------------------------
# Wrapper
# ---------------------------------------------------------------------------
@functools.partial(jax.jit, static_argnames=("block_rows", "block_ff"))
def feed_forward(x, w1_p, b1_p, w2_p, b2_p, *, block_rows=1024, block_ff=1024):
    """x: (..., d_model). Params must come from prepare_ffn_params.

    Returns same shape/dtype as x. Eval-mode FeedForward.
    """
    orig_shape = x.shape
    d_model = orig_shape[-1]
    d_model_p = w1_p.shape[0]
    d_ff_p = w1_p.shape[1]

    x2d = x.reshape(-1, d_model)
    n = x2d.shape[0]

    out_dtype = x.dtype
    out_bytes = jnp.dtype(out_dtype).itemsize
    use_scratch = jnp.dtype(out_dtype) != jnp.dtype(jnp.float32)

    # ---- row tile: 16-aligned (bf16 sublane packing = 16 rows/vreg) ----
    tm0 = min(_round_up(block_rows, 16), _round_up(max(n, 1), 16))
    # Megacore (v7x has 2 TCs): ensure >= 2 row tiles when the workload allows.
    if tm0 >= 32 and _round_up(n, tm0) // tm0 < 2:
        tm0 = max(16, _round_up((n + 1) // 2, 16))

    # ---- VMEM budgeting (block_bytes already includes double buffering) ----
    def block_bytes(tm, tk):
        bb, bf = 2, 4
        b = (2 * tm * d_model_p * bb          # x tile (bf16)
             + 2 * d_model_p * tk * bb        # W1 chunk (bf16)
             + 2 * 8 * tk * bf                # b1 chunk (sublane-padded)
             + 2 * tk * d_model_p * bb        # W2 chunk (bf16)
             + 2 * 8 * d_model_p * bf         # b2
             + 2 * tm * d_model_p * out_bytes)  # out tile
        if use_scratch:
            b += tm * d_model_p * 4           # f32 accumulator scratch
        return b

    vmem_cap = _vmem_capacity_bytes()
    budget = int(vmem_cap * 0.85)             # never request the full VMEM

    # tk candidates: divisors of d_ff_p (a multiple of 128) that are multiples
    # of 128 and <= block_ff, largest first. 128 always qualifies.
    tk_req = min(_round_up(block_ff, 128), d_ff_p)
    tk_cands = [c for c in range(tk_req, 127, -128) if d_ff_p % c == 0] or [128]

    tm, tk = None, None
    tm_c = tm0
    while True:
        for tk_c in tk_cands:                 # shrink tk first (keeps intensity ~tm)
            if block_bytes(tm_c, tk_c) <= budget:
                tm, tk = tm_c, tk_c
                break
        if tm is not None or tm_c <= 16:
            break
        tm_c = max(16, ((tm_c // 2) // 16) * 16)  # then shrink tm
    if tm is None:
        tm, tk = tm_c, tk_cands[-1]

    n_p = _round_up(n, tm)
    num_row_tiles = n_p // tm
    grid = (num_row_tiles, d_ff_p // tk)

    # ---- pad + cast activations (per call; weights already prepared) ----
    pad_rows, pad_cols = n_p - n, d_model_p - d_model
    if pad_rows or pad_cols:
        x2d = jnp.pad(x2d, ((0, pad_rows), (0, pad_cols)))
    x_p = x2d.astype(jnp.bfloat16)

    bbytes = block_bytes(tm, tk)
    vmem_limit = int(min(max(bbytes + (4 << 20), 8 << 20), budget))

    cost = pl.CostEstimate(
        flops=4 * n_p * d_model_p * d_ff_p,                    # two GEMMs, 2*M*N*K each
        transcendentals=0,
        bytes_accessed=(n_p * d_model_p * 2                    # x in (bf16)
                        + n_p * d_model_p * out_bytes          # out writeback
                        + num_row_tiles * 2 * d_model_p * d_ff_p * 2   # W1+W2 per row tile
                        + num_row_tiles * (d_ff_p + d_model_p) * 4),   # biases per row tile
    )

    kernel = _ffn_kernel_scratch if use_scratch else _ffn_kernel_out_accum
    scratch = ([pltpu.VMEM((tm, d_model_p), jnp.float32)] if use_scratch else [])

    out = pl.pallas_call(
        kernel,
        out_shape=jax.ShapeDtypeStruct((n_p, d_model_p), out_dtype),
        grid_spec=pltpu.PrefetchScalarGridSpec(
            num_scalar_prefetch=0,
            grid=grid,
            in_specs=[
                pl.BlockSpec((tm, d_model_p), lambda i, k: (i, 0)),   # x rows (const over k)
                pl.BlockSpec((d_model_p, tk), lambda i, k: (0, k)),   # W1 d_ff chunk
                pl.BlockSpec((1, tk), lambda i, k: (0, k)),           # b1 chunk
                pl.BlockSpec((tk, d_model_p), lambda i, k: (k, 0)),   # W2 d_ff chunk
                pl.BlockSpec((1, d_model_p), lambda i, k: (0, 0)),    # b2
            ],
            out_specs=pl.BlockSpec((tm, d_model_p), lambda i, k: (i, 0)),
            scratch_shapes=scratch,
        ),
        compiler_params=pltpu.CompilerParams(
            dimension_semantics=("parallel", "arbitrary"),
            vmem_limit_bytes=vmem_limit,
        ),
        cost_estimate=cost,
    )(x_p, w1_p, b1_p, w2_p, b2_p)

    return out[:n, :d_model].reshape(orig_shape)


# ---------------------------------------------------------------------------
# Init helper (PyTorch nn.Linear-style; weights stored (in, out) so the kernel
# computes x @ W, same math as x @ weight.T)
# ---------------------------------------------------------------------------
def init_feed_forward_params(key, d_model, d_ff, dtype=jnp.float32):
    k1, k2, k3, k4 = jax.random.split(key, 4)
    bound1 = 1.0 / (d_model ** 0.5)
    bound2 = 1.0 / (d_ff ** 0.5)
    w1 = jax.random.uniform(k1, (d_model, d_ff), dtype, -bound1, bound1)
    b1 = jax.random.uniform(k2, (d_ff,), dtype, -bound1, bound1)
    w2 = jax.random.uniform(k3, (d_ff, d_model), dtype, -bound2, bound2)
    b2 = jax.random.uniform(k4, (d_model,), dtype, -bound2, bound2)
    return w1, b1, w2, b2


if __name__ == "__main__":
    # Small shapes implied by the module: (batch, seq, d_model), d_ff=400 default.
    batch, seq, d_model, d_ff = 2, 8, 32, 400

    key = jax.random.PRNGKey(0)
    kx, kp = jax.random.split(key)
    x = jax.random.normal(kx, (batch, seq, d_model), dtype=jnp.float32)
    w1, b1, w2, b2 = init_feed_forward_params(kp, d_model, d_ff)

    # One-time weight pad/cast (no per-call pad/cast passes over the weights).
    w1_p, b1_p, w2_p, b2_p = prepare_ffn_params(w1, b1, w2, b2)

    # block_ff=256 -> two d_ff chunks at this size: exercises the accumulate /
    # pl.when init/finalize path as well as the f32 accumulate-into-output path.
    out = feed_forward(x, w1_p, b1_p, w2_p, b2_p, block_rows=512, block_ff=256)
    out = jax.block_until_ready(out)

    # Pure-JAX f32 reference (dropout = identity in eval mode). Kernel feeds the
    # MXU bf16 inputs with f32 accumulation -> compare with bf16-level tolerance.
    ref = jnp.maximum(x @ w1 + b1, 0.0) @ w2 + b2
    assert out.shape == x.shape and out.dtype == x.dtype
    assert jnp.allclose(out, ref, atol=2e-2, rtol=2e-2), "mismatch vs reference"

    print("KERNEL_OK")
</pallas_src>

<mosaic_0001>
module attributes {stable_mosaic.version = 11 : i64} {
  func.func @_ffn_kernel_out_accum(%arg0: i32, %arg1: i32, %arg2: memref<16x128xbf16, #tpu.memory_space<vmem>>, %arg3: memref<128x256xbf16, #tpu.memory_space<vmem>>, %arg4: memref<1x256xf32, #tpu.memory_space<vmem>>, %arg5: memref<256x128xbf16, #tpu.memory_space<vmem>>, %arg6: memref<1x128xf32, #tpu.memory_space<vmem>>, %arg7: memref<16x128xf32, #tpu.memory_space<vmem>>) attributes {dimension_semantics = [#tpu.dimension_semantics<parallel>, #tpu.dimension_semantics<arbitrary>], iteration_bounds = array<i64: 1, 2>, scalar_prefetch = 0 : i64, scratch_operands = 0 : i64, tpu.core_type = #tpu.core_type<tc>, window_params = [{transform_indices = @transform_0, window_bounds = array<i64: 16, 128>}, {transform_indices = @transform_1, window_bounds = array<i64: 128, 256>}, {transform_indices = @transform_2, window_bounds = array<i64: 1, 256>}, {transform_indices = @transform_3, window_bounds = array<i64: 256, 128>}, {pipeline_mode = #tpu.pipeline_mode<synchronous>, transform_indices = @transform_4, window_bounds = array<i64: 1, 128>}, {transform_indices = @transform_5, window_bounds = array<i64: 16, 128>}]} {
    %c0_i32 = arith.constant 0 : i32
    %0 = arith.cmpi eq, %arg1, %c0_i32 : i32
    %1 = arith.extui %0 : i1 to i32
    %c0_i32_0 = arith.constant 0 : i32
    %2 = arith.cmpi ne, %1, %c0_i32_0 : i32
    scf.if %2 {
      %cst_15 = arith.constant 0.000000e+00 : f32
      %20 = vector.broadcast %cst_15 : f32 to vector<16x128xf32>
      %c0_16 = arith.constant 0 : index
      %c0_17 = arith.constant 0 : index
      %21 = vector.load %arg7[%c0_16, %c0_17] : memref<16x128xf32, #tpu.memory_space<vmem>>, vector<16x128xf32>
      tpu.vector_store %arg7[%c0_16, %c0_17], %20 {strides = array<i32>} : memref<16x128xf32, #tpu.memory_space<vmem>>, vector<16x128xf32>,
    } else {
    }
    %c0 = arith.constant 0 : index
    %c0_1 = arith.constant 0 : index
    %3 = vector.load %arg2[%c0, %c0_1] : memref<16x128xbf16, #tpu.memory_space<vmem>>, vector<16x128xbf16>
    %c0_2 = arith.constant 0 : index
    %c0_3 = arith.constant 0 : index
    %4 = vector.load %arg3[%c0_2, %c0_3] : memref<128x256xbf16, #tpu.memory_space<vmem>>, vector<128x256xbf16>
    %cst = arith.constant dense<0.000000e+00> : vector<16x256xf32>
    %5 = tpu.matmul %3, %4, %cst {dimension_numbers = #tpu.dot_dimension_numbers<[1], [0], [0], [1], [0, 0, 1, 1], [], []>} : vector<16x128xbf16>, vector<128x256xbf16>, vector<16x256xf32> -> vector<16x256xf32>
    %c0_4 = arith.constant 0 : index
    %c0_5 = arith.constant 0 : index
    %6 = vector.load %arg4[%c0_4, %c0_5] : memref<1x256xf32, #tpu.memory_space<vmem>>, vector<1x256xf32>
    %7 = vector.broadcast %6 : vector<1x256xf32> to vector<16x256xf32>
    %8 = arith.addf %5, %7 : vector<16x256xf32>
    %cst_6 = arith.constant 0.000000e+00 : f32
    %9 = vector.broadcast %cst_6 : f32 to vector<16x256xf32>
    %10 = arith.maximumf %8, %9 : vector<16x256xf32>
    %c0_7 = arith.constant 0 : index
    %c0_8 = arith.constant 0 : index
    %11 = vector.load %arg7[%c0_7, %c0_8] : memref<16x128xf32, #tpu.memory_space<vmem>>, vector<16x128xf32>
    %12 = arith.truncf %10 : vector<16x256xf32> to vector<16x256xbf16>
    %c0_9 = arith.constant 0 : index
    %c0_10 = arith.constant 0 : index
    %13 = vector.load %arg5[%c0_9, %c0_10] : memref<256x128xbf16, #tpu.memory_space<vmem>>, vector<256x128xbf16>
    %cst_11 = arith.constant dense<0.000000e+00> : vector<16x128xf32>
    %14 = tpu.matmul %12, %13, %cst_11 {dimension_numbers = #tpu.dot_dimension_numbers<[1], [0], [0], [1], [0, 0, 1, 1], [], []>} : vector<16x256xbf16>, vector<256x128xbf16>, vector<16x128xf32> -> vector<16x128xf32>
    %15 = arith.addf %11, %14 : vector<16x128xf32>
    %c0_12 = arith.constant 0 : index
    %c0_13 = arith.constant 0 : index
    %16 = vector.load %arg7[%c0_12, %c0_13] : memref<16x128xf32, #tpu.memory_space<vmem>>, vector<16x128xf32>
    tpu.vector_store %arg7[%c0_12, %c0_13], %15 {strides = array<i32>} : memref<16x128xf32, #tpu.memory_space<vmem>>, vector<16x128xf32>,
    %c1_i32 = arith.constant 1 : i32
    %17 = arith.cmpi eq, %arg1, %c1_i32 : i32
    %18 = arith.extui %17 : i1 to i32
    %c0_i32_14 = arith.constant 0 : i32
    %19 = arith.cmpi ne, %18, %c0_i32_14 : i32
    scf.if %19 {
      %c0_15 = arith.constant 0 : index
      %c0_16 = arith.constant 0 : index
      %20 = vector.load %arg7[%c0_15, %c0_16] : memref<16x128xf32, #tpu.memory_space<vmem>>, vector<16x128xf32>
      %c0_17 = arith.constant 0 : index
      %c0_18 = arith.constant 0 : index
      %21 = vector.load %arg6[%c0_17, %c0_18] : memref<1x128xf32, #tpu.memory_space<vmem>>, vector<1x128xf32>
      %22 = vector.broadcast %21 : vector<1x128xf32> to vector<16x128xf32>
      %23 = arith.addf %20, %22 : vector<16x128xf32>
      %c0_19 = arith.constant 0 : index
      %c0_20 = arith.constant 0 : index
      %24 = vector.load %arg7[%c0_19, %c0_20] : memref<16x128xf32, #tpu.memory_space<vmem>>, vector<16x128xf32>
      tpu.vector_store %arg7[%c0_19, %c0_20], %23 {strides = array<i32>} : memref<16x128xf32, #tpu.memory_space<vmem>>, vector<16x128xf32>,
    } else {
    }
    return
  }
  func.func @transform_0(%arg0: i32, %arg1: i32) -> (i32, i32) {
    %c0_i32 = arith.constant 0 : i32
    %c0_i32_0 = arith.constant 0 : i32
    return %arg0, %c0_i32 : i32, i32
  }
  func.func @transform_1(%arg0: i32, %arg1: i32) -> (i32, i32) {
    %c0_i32 = arith.constant 0 : i32
    %c0_i32_0 = arith.constant 0 : i32
    return %c0_i32, %arg1 : i32, i32
  }
  func.func @transform_2(%arg0: i32, %arg1: i32) -> (i32, i32) {
    %c0_i32 = arith.constant 0 : i32
    %c0_i32_0 = arith.constant 0 : i32
    return %c0_i32, %arg1 : i32, i32
  }
  func.func @transform_3(%arg0: i32, %arg1: i32) -> (i32, i32) {
    %c0_i32 = arith.constant 0 : i32
    %c0_i32_0 = arith.constant 0 : i32
    return %arg1, %c0_i32 : i32, i32
  }
  func.func @transform_4(%arg0: i32, %arg1: i32) -> (i32, i32) {
    %c0_i32 = arith.constant 0 : i32
    %c0_i32_0 = arith.constant 0 : i32
    %c0_i32_1 = arith.constant 0 : i32
    return %c0_i32, %c0_i32_0 : i32, i32
  }
  func.func @transform_5(%arg0: i32, %arg1: i32) -> (i32, i32) {
    %c0_i32 = arith.constant 0 : i32
    %c0_i32_0 = arith.constant 0 : i32
    return %arg0, %c0_i32 : i32, i32
  }
}

</mosaic_0001>

<llo_original>
// kernel: feed_forward.1
$region0: #{feed_forward.1}
  #allocation0 [shape = 'u32[]', space=smem, size = 0x4, offset = 0x4, fixed_abs, tag = 'smem constant byte address 0x4 - core index']
  #allocation1 [shape = 'u32[144,128]{1,0:T(1,128)}', space=vmem, size = 0x12000, scoped, tag = 'internal scratch']
  %s0 = inlined_call_operand.vmem [shape: bf16[16,128], index: 0, kind: input, shape index: {}]
  %s1 = inlined_call_operand.hbm [shape: bf16[128,512], index: 1, kind: input, shape index: {}]
  %s2 = inlined_call_operand.vmem [shape: f32[1,512], index: 2, kind: input, shape index: {}]
  %s3 = inlined_call_operand.hbm [shape: bf16[512,128], index: 3, kind: input, shape index: {}]
  %s4 = inlined_call_operand.vmem [shape: f32[1,128], index: 4, kind: input, shape index: {}]
  %s5 = inlined_call_operand.vmem [shape: f32[16,128], index: 5, kind: output, shape index: {}]
  %s6 = sld [smem:[#allocation0]]
  $region69: #{feed_forward.1} parent=0
    _
  %s8 = ssub.s32 1, %s6
  %s9 = scalar_select 0, %s8, %s6
  $region1: #{feed_forward.1} parent=0
    #allocation2 [shape = 'u8[131072]{0}', space=vmem, size = 0x20000, scoped, tag = 'input window, operand 1']
    #allocation3 [shape = 's32[2]{0}', space=sflag, size = 0x8, scoped, tag = 'scoped memory for feed_forward.1']
    #allocation4 [shape = 'u8[131072]{0}', space=vmem, size = 0x20000, scoped, tag = 'input window, operand 3']
    #allocation5 [shape = 's32[2]{0}', space=sflag, size = 0x8, scoped, tag = 'scoped memory for feed_forward.1']
    %10 = vsyncpa [#allocation3], 0
    %s11 = scalar_lea.sflag [#allocation3], 1
    %12 = vsyncpa %s11, 0
    %13 = vsyncpa [#allocation5], 0
    %s14 = scalar_lea.sflag [#allocation5], 1
    %15 = vsyncpa %s14, 0
    loop: start=0, step=1, limit=4
    $region2: #{feed_forward.1} parent=1 // loop_pre_header
      _
    $region3: #{feed_forward.1} parent=1 // loop_header
      %s17 = sphi 0, %s21
      %p18 = scmp.ge.s32.totalorder %s17, 4
      %s24 = sphi 0, %s36
      %s25 = sphi 0, %s32
      %s26 = sphi 0, %s24
      %s27 = sphi 0, %s25
      %s28 = sphi 0, %s26
      %s29 = sphi 0, %s27
      %s39 = sphi 0, %s41
      %s42 = sphi 0, %s39
      %s43 = sphi 0, %s42
      %s59 = sphi 0, %s43
      %s65 = sphi 0, %s67
      %s68 = sphi 0, %s65
      %s69 = sphi 0, %s68
      %s85 = sphi 0, %s69
      %s91 = sphi 0, %s93
      %s94 = sphi 0, %s91
      %s95 = sphi 0, %s94
      %s111 = sphi 0, %s95
      %s117 = sphi 0, %s119
      %s120 = sphi 0, %s117
      %s121 = sphi 0, %s120
      %s137 = sphi 0, %s121
      %s141 = sphi 0, %s141
      %s143 = sphi 0, %s141
      %s144 = sphi 0, %s143
      %s158 = sphi 0, %s144
      %s164 = sphi 0, %s166
      %s167 = sphi 0, %s164
      %s168 = sphi 0, %s167
      %s184 = sphi 0, %s168
    $region4: #{feed_forward.1} parent=1 // loop_header_branch
      %20 = sbr.rel (%p18) target = $region8
    $region5: #{feed_forward.1} parent=1 // loop_body
      %s22 = ssub.s32 %s17, 1
      %s23 = ssub.s32 %s17, 2
      %s30 = sadd.s32 1, %s25
      %p31 = scmp.ge.s32.totalorder %s30, 2
      %s32 = scalar_select %p31, 0, %s30
      %s33 = sadd.s32 1, %s24
      %s34 = scalar_select %p31, %s33, %s24
      %p35 = scmp.ge.s32.totalorder %s34, 1
      %s36 = scalar_select %p35, 0, %s34
      %s37 = ssub.s32 %s24, %s36
      %p38 = scmp.eq.s32.totalorder %s37, 0
      %s40 = sadd.s32 %s39, 1
      %s41 = scalar_select %p38, %s39, %s40
      %p44 = pneg %p38
      %p45 = scmp.eq.s32.totalorder %s17, 1
      %p46 = por %p44, %p45
      %p47 = scmp.ne.s32.totalorder %s39, %s42
      %p48 = scmp.eq.s32.totalorder %s17, 0
      %p49 = por %p47, %p48
      %p50 = scmp.ne.s32.totalorder %s39, %s42
      %p51 = scmp.eq.s32.totalorder %s22, 1
      %p52 = por %p50, %p51
      %p53 = scmp.ne.s32.totalorder %s42, %s43
      %p54 = scmp.eq.s32.totalorder %s22, 0
      %p55 = por %p53, %p54
      %p56 = scmp.ne.s32.totalorder %s42, %s43
      %p57 = scmp.eq.s32.totalorder %s23, 1
      %p58 = por %p56, %p57
      %p60 = scmp.ne.s32.totalorder %s43, %s59
      %p61 = scmp.eq.s32.totalorder %s23, 0
      %p62 = por %p60, %p61
      %s63 = ssub.s32 %s25, %s32
      %p64 = scmp.eq.s32.totalorder %s63, 0
      %s66 = sadd.s32 %s65, 1
      %s67 = scalar_select %p64, %s65, %s66
      %p70 = pneg %p64
      %p71 = scmp.eq.s32.totalorder %s17, 1
      %p72 = por %p70, %p71
      %p73 = scmp.ne.s32.totalorder %s65, %s68
      %p74 = scmp.eq.s32.totalorder %s17, 0
      %p75 = por %p73, %p74
      %p76 = scmp.ne.s32.totalorder %s65, %s68
      %p77 = scmp.eq.s32.totalorder %s22, 1
      %p78 = por %p76, %p77
      %p79 = scmp.ne.s32.totalorder %s68, %s69
      %p80 = scmp.eq.s32.totalorder %s22, 0
      %p81 = por %p79, %p80
      %p82 = scmp.ne.s32.totalorder %s68, %s69
      %p83 = scmp.eq.s32.totalorder %s23, 1
      %p84 = por %p82, %p83
      %p86 = scmp.ne.s32.totalorder %s69, %s85
      %p87 = scmp.eq.s32.totalorder %s23, 0
      %p88 = por %p86, %p87
      %s89 = ssub.s32 %s25, %s32
      %p90 = scmp.eq.s32.totalorder %s89, 0
      %s92 = sadd.s32 %s91, 1
      %s93 = scalar_select %p90, %s91, %s92
      %p96 = pneg %p90
      %p97 = scmp.eq.s32.totalorder %s17, 1
      %p98 = por %p96, %p97
      %p99 = scmp.ne.s32.totalorder %s91, %s94
      %p100 = scmp.eq.s32.totalorder %s17, 0
      %p101 = por %p99, %p100
      %p102 = scmp.ne.s32.totalorder %s91, %s94
      %p103 = scmp.eq.s32.totalorder %s22, 1
      %p104 = por %p102, %p103
      %p105 = scmp.ne.s32.totalorder %s94, %s95
      %p106 = scmp.eq.s32.totalorder %s22, 0
      %p107 = por %p105, %p106
      %p108 = scmp.ne.s32.totalorder %s94, %s95
      %p109 = scmp.eq.s32.totalorder %s23, 1
      %p110 = por %p108, %p109
      %p112 = scmp.ne.s32.totalorder %s95, %s111
      %p113 = scmp.eq.s32.totalorder %s23, 0
      %p114 = por %p112, %p113
      %s115 = ssub.s32 %s25, %s32
      %p116 = scmp.eq.s32.totalorder %s115, 0
      %s118 = sadd.s32 %s117, 1
      %s119 = scalar_select %p116, %s117, %s118
      %p122 = pneg %p116
      %p123 = scmp.eq.s32.totalorder %s17, 1
      %p124 = por %p122, %p123
      %p125 = scmp.ne.s32.totalorder %s117, %s120
      %p126 = scmp.eq.s32.totalorder %s17, 0
      %p127 = por %p125, %p126
      %p128 = scmp.ne.s32.totalorder %s117, %s120
      %p129 = scmp.eq.s32.totalorder %s22, 1
      %p130 = por %p128, %p129
      %p131 = scmp.ne.s32.totalorder %s120, %s121
      %p132 = scmp.eq.s32.totalorder %s22, 0
      %p133 = por %p131, %p132
      %p134 = scmp.ne.s32.totalorder %s120, %s121
      %p135 = scmp.eq.s32.totalorder %s23, 1
      %p136 = por %p134, %p135
      %p138 = scmp.ne.s32.totalorder %s121, %s137
      %p139 = scmp.eq.s32.totalorder %s23, 0
      %p140 = por %p138, %p139
      %s142 = sadd.s32 %s141, 1
      %p145 = scmp.eq.s32.totalorder %s17, 1
      %p146 = scmp.ne.s32.totalorder %s141, %s143
      %p147 = scmp.eq.s32.totalorder %s17, 0
      %p148 = por %p146, %p147
      %p149 = scmp.ne.s32.totalorder %s141, %s143
      %p150 = scmp.eq.s32.totalorder %s22, 1
      %p151 = por %p149, %p150
      %p152 = scmp.ne.s32.totalorder %s143, %s144
      %p153 = scmp.eq.s32.totalorder %s22, 0
      %p154 = por %p152, %p153
      %p155 = scmp.ne.s32.totalorder %s143, %s144
      %p156 = scmp.eq.s32.totalorder %s23, 1
      %p157 = por %p155, %p156
      %p159 = scmp.ne.s32.totalorder %s144, %s158
      %p160 = scmp.eq.s32.totalorder %s23, 0
      %p161 = por %p159, %p160
      %s162 = ssub.s32 %s24, %s36
      %p163 = scmp.eq.s32.totalorder %s162, 0
      %s165 = sadd.s32 %s164, 1
      %s166 = scalar_select %p163, %s164, %s165
      %p169 = pneg %p163
      %p170 = scmp.eq.s32.totalorder %s17, 1
      %p171 = por %p169, %p170
      %p172 = scmp.ne.s32.totalorder %s164, %s167
      %p173 = scmp.eq.s32.totalorder %s17, 0
      %p174 = por %p172, %p173
      %p175 = scmp.ne.s32.totalorder %s164, %s167
      %p176 = scmp.eq.s32.totalorder %s22, 1
      %p177 = por %p175, %p176
      %p178 = scmp.ne.s32.totalorder %s167, %s168
      %p179 = scmp.eq.s32.totalorder %s22, 0
      %p180 = por %p178, %p179
      %p181 = scmp.ne.s32.totalorder %s167, %s168
      %p182 = scmp.eq.s32.totalorder %s23, 1
      %p183 = por %p181, %p182
      %p185 = scmp.ne.s32.totalorder %s168, %s184
      %p186 = scmp.eq.s32.totalorder %s23, 0
      %p187 = por %p185, %p186
      %p188 = scmp.le.s32.totalorder 1, %s17
      %p189 = scmp.lt.s32.totalorder %s17, 3
      %p190 = pnand %p188, %p189
      %p191 = pneg %p190
      // Predicated region
      $region9: #{feed_forward.1} parent=5 // pred_check
        _
      $region10: #{feed_forward.1} parent=5 // pred_check_branch
        %193 = sbr.rel (%p190) target = $region12
      $region11: #{feed_forward.1} parent=5 // pred_region
        %s194 = ssub.s32 %s17, 1
        // Predicated region
        $region13: #{feed_forward.1} parent=11 // pred_check
          %p195 = pneg %p55
        $region14: #{feed_forward.1} parent=11 // pred_check_branch
          %197 = sbr.rel (%p195) target = $region16
        $region15: #{feed_forward.1} parent=11 // pred_region
          %s198 = smul.u32 2, %s26
          %p199 = scmp.lt.s32.totalorder %s198, 1
          %s200 = scalar_select %p199, %s198, 1
          %s201 = smul.addr %s200, 4
          %s202 = scalar_lea.vmem %s0, %s201
          %s203 = smul.u32 2, %s26
        $region16: #{feed_forward.1} parent=11 // pred_fallthru
          _
        // Predicated region
        $region17: #{feed_forward.1} parent=11 // pred_check
          %p204 = pneg %p154
        $region18: #{feed_forward.1} parent=11 // pred_check_branch
          %206 = sbr.rel (%p204) target = $region20
        $region19: #{feed_forward.1} parent=11 // pred_region
          _
        $region20: #{feed_forward.1} parent=11 // pred_fallthru
          _
      $region12: #{feed_forward.1} parent=5 // pred_fallthru
        _
      %p207 = scmp.lt.s32.totalorder %s17, 2
      // Predicated region
      $region21: #{feed_forward.1} parent=5 // pred_check
        %p208 = pneg %p207
      $region22: #{feed_forward.1} parent=5 // pred_check_branch
        %210 = sbr.rel (%p208) target = $region24
      $region23: #{feed_forward.1} parent=5 // pred_region
        // Predicated region
        $region25: #{feed_forward.1} parent=23 // pred_check
          %p211 = pneg %p75
        $region26: #{feed_forward.1} parent=23 // pred_check_branch
          %213 = sbr.rel (%p211) target = $region28
        $region27: #{feed_forward.1} parent=23 // pred_region
          %s214 = sand.u32 %s65, 1
          %s215 = scalar_lea.sflag [#allocation3], %s214
          %s216 = sand.u32 %s65, 1
          %s217 = smul.addr %s216, 128
          %s218 = scalar_lea.vmem [#allocation2], %s217
          %s219 = smul.u32 2, %s25
          %s221 = ssub.s32 2048, 2048
          %222 = vsyncadd %s215, %s221
          %s223 = smul.addr %s219, 64
          %s224 = scalar_lea.hbm %s1, %s223
          %s225 = sshll.u32 %s218, 4
          %s226 = int_to_ptr.vmem [resolvable:$true] %s225
          %231 = dma.hbm_to_vmem [thread:$0]  %s224, 2048, %s226, %s215, 256, 128, 8
        $region28: #{feed_forward.1} parent=23 // pred_fallthru
          _
        // Predicated region
        $region29: #{feed_forward.1} parent=23 // pred_check
          %p232 = pneg %p101
        $region30: #{feed_forward.1} parent=23 // pred_check_branch
          %234 = sbr.rel (%p232) target = $region32
        $region31: #{feed_forward.1} parent=23 // pred_region
          %s235 = smul.u32 2, %s25
          %p236 = scmp.lt.s32.totalorder %s235, 3
          %s237 = scalar_select %p236, %s235, 3
          %s238 = scalar_lea.vmem %s2, %s237
          %s239 = smul.u32 2, %s25
        $region32: #{feed_forward.1} parent=23 // pred_fallthru
          _
        // Predicated region
        $region33: #{feed_forward.1} parent=23 // pred_check
          %p240 = pneg %p127
        $region34: #{feed_forward.1} parent=23 // pred_check_branch
          %242 = sbr.rel (%p240) target = $region36
        $region35: #{feed_forward.1} parent=23 // pred_region
          %s243 = sand.u32 %s117, 1
          %s244 = scalar_lea.sflag [#allocation5], %s243
          %s245 = sand.u32 %s117, 1
          %s246 = smul.addr %s245, 128
          %s247 = scalar_lea.vmem [#allocation4], %s246
          %s248 = smul.u32 32, %s25
          %s250 = ssub.s32 2048, 2048
          %251 = vsyncadd %s244, %s250
          %s252 = smul.addr %s248, 64
          %s253 = scalar_lea.hbm %s3, %s252
          %s254 = sshll.u32 %s247, 4
          %s255 = int_to_ptr.vmem [resolvable:$true] %s254
          %260 = dma.hbm_to_vmem [thread:$0]  %s253, 2048, %s255, %s244, 64, 64, 4
        $region36: #{feed_forward.1} parent=23 // pred_fallthru
          _
      $region24: #{feed_forward.1} parent=5 // pred_fallthru
        _
      %p261 = scmp.le.s32.totalorder 1, %s17
      %p262 = scmp.lt.s32.totalorder %s17, 3
      %p263 = pnand %p261, %p262
      %p264 = pneg %p263
      // Predicated region
      $region37: #{feed_forward.1} parent=5 // pred_check
        _
      $region38: #{feed_forward.1} parent=5 // pred_check_branch
        %266 = sbr.rel (%p263) target = $region40
      $region39: #{feed_forward.1} parent=5 // pred_region
        %s267 = ssub.s32 %s17, 1
        %s268 = sand.u32 %s68, 1
        %s269 = scalar_lea.sflag [#allocation3], %s268
        %s270 = sand.u32 %s68, 1
        %s271 = smul.addr %s270, 128
        %s272 = scalar_lea.vmem [#allocation2], %s271
        // Predicated region
        $region41: #{feed_forward.1} parent=39 // pred_check
          %p273 = pneg %p81
        $region42: #{feed_forward.1} parent=39 // pred_check_branch
          %275 = sbr.rel (%p273) target = $region44
        $region43: #{feed_forward.1} parent=39 // pred_region
          %276 = dma.done %s269, 2048
        $region44: #{feed_forward.1} parent=39 // pred_fallthru
          _
        %s277 = sand.u32 %s120, 1
        %s278 = scalar_lea.sflag [#allocation5], %s277
        %s279 = sand.u32 %s120, 1
        %s280 = smul.addr %s279, 128
        %s281 = scalar_lea.vmem [#allocation4], %s280
        // Predicated region
        $region45: #{feed_forward.1} parent=39 // pred_check
          %p282 = pneg %p133
        $region46: #{feed_forward.1} parent=39 // pred_check_branch
          %284 = sbr.rel (%p282) target = $region48
        $region47: #{feed_forward.1} parent=39 // pred_region
          %285 = dma.done %s278, 2048
        $region48: #{feed_forward.1} parent=39 // pred_fallthru
          _
        %s286 = smul.u32 2, %s26
        %p287 = scmp.lt.s32.totalorder %s286, 1
        %s288 = scalar_select %p287, %s286, 1
        %s289 = smul.addr %s288, 4
        %s290 = scalar_lea.vmem %s0, %s289
        %p291 = pneg %p55
        %p292 = pneg %p52
        %s293 = sand.u32 %s68, 1
        %s294 = scalar_lea.sflag [#allocation3], %s293
        %s295 = sand.u32 %s68, 1
        %s296 = smul.addr %s295, 128
        %s297 = scalar_lea.vmem [#allocation2], %s296
        %p298 = pneg %p81
        %p299 = pneg %p78
        %s300 = smul.u32 2, %s27
        %p301 = scmp.lt.s32.totalorder %s300, 3
        %s302 = scalar_select %p301, %s300, 3
        %s303 = scalar_lea.vmem %s2, %s302
        %p304 = pneg %p107
        %p305 = pneg %p104
        %s306 = sand.u32 %s120, 1
        %s307 = scalar_lea.sflag [#allocation5], %s306
        %s308 = sand.u32 %s120, 1
        %s309 = smul.addr %s308, 128
        %s310 = scalar_lea.vmem [#allocation4], %s309
        %p311 = pneg %p133
        %p312 = pneg %p130
        %p313 = pneg %p154
        %p314 = pneg %p151
        %p315 = pneg %p180
        %p316 = pneg %p177
        %s317 = smul.u32 2, %s26
        %p318 = scmp.lt.s32.totalorder %s317, 1
        %s319 = scalar_select %p318, %s317, 1
        %s320 = smul.addr %s319, 8
        %s321 = scalar_lea.vmem %s5, %s320
        %s322 = smul.u32 2, %s26
        %p323 = scmp.lt.s32.totalorder %s322, 1
        %s324 = scalar_select %p323, %s322, 1
        %s325 = smul.addr %s324, 4
        %s326 = scalar_lea.vmem %s0, %s325
        %s327 = smul.u32 2, %s26
        %s328 = smul.u32 2, %s27
        %s329 = smul.u32 2, %s27
        %p330 = scmp.lt.s32.totalorder %s329, 3
        %s331 = scalar_select %p330, %s329, 3
        %s332 = scalar_lea.vmem %s2, %s331
        %s333 = smul.u32 2, %s27
        %s334 = smul.u32 32, %s27
        %s335 = smul.u32 2, %s26
        %p336 = scmp.lt.s32.totalorder %s335, 1
        %s337 = scalar_select %p336, %s335, 1
        %s338 = smul.addr %s337, 8
        %s339 = scalar_lea.vmem %s5, %s338
        %s340 = smul.u32 2, %s26
        %p342 = scmp.eq.s32.totalorder %s27, 0
        // Predicated region
        $region49: #{feed_forward.1} parent=39 // pred_check
          %p343 = pneg %p342
        $region50: #{feed_forward.1} parent=39 // pred_check_branch
          %345 = sbr.rel (%p343) target = $region52
        $region51: #{feed_forward.1} parent=39 // pred_region
          %346 = vst [vmem:[%s339] sm:$0xff] 0.0
          %347 = vst [vmem:[%s339 + $0x8] sm:$0xff] 0.0
        $region52: #{feed_forward.1} parent=39 // pred_fallthru
          _
        %v348 = vld [vmem:[%s326] sm:$0xf]
        %v349 = vld [vmem:[%s326 + $0x4] sm:$0xf]
        %v350 = vld [vmem:[%s272] sm:$0xff]
        %v351 = vld [vmem:[%s272 + $0x8] sm:$0xff]
        %v352 = vld [vmem:[%s272 + $0x10] sm:$0xff]
        %v353 = vld [vmem:[%s272 + $0x18] sm:$0xff]
        %v354 = vld [vmem:[%s272 + $0x20] sm:$0xff]
        %v355 = vld [vmem:[%s272 + $0x28] sm:$0xff]
        %v356 = vld [vmem:[%s272 + $0x30] sm:$0xff]
        %v357 = vld [vmem:[%s272 + $0x38] sm:$0xff]
        %v358 = vld [vmem:[%s272 + $0x40] sm:$0xff]
        %v359 = vld [vmem:[%s272 + $0x48] sm:$0xff]
        %v360 = vld [vmem:[%s272 + $0x50] sm:$0xff]
        %v361 = vld [vmem:[%s272 + $0x58] sm:$0xff]
        %v362 = vld [vmem:[%s272 + $0x60] sm:$0xff]
        %v363 = vld [vmem:[%s272 + $0x68] sm:$0xff]
        %v364 = vld [vmem:[%s272 + $0x70] sm:$0xff]
        %v365 = vld [vmem:[%s272 + $0x78] sm:$0xff]
        %v366 = vld [vmem:[%s332] sm:$0x3]
        %v368 = vlaneseq
        %v369 = vshrl.u32 %v368, 7
        %v370 = vsub.s32 0, %v369
        %v371 = vrot.slane %v366, %v370
        %v372 = vlaneseq
        %v373 = vshrl.u32 %v372, 7
        %v374 = vsub.s32 1, %v373
        %v375 = vrot.slane %v366, %v374
        %v380 = vunpack.c.l.b16 %v348
        %v381 = vunpack.c.l.b16 %v349
        %v382 = vpack.c.b16 %v381, %v380
        %v400 = vunpack.c.l.b16 %v350
        %v401 = vunpack.c.h.b16 %v350
        %v402 = vunpack.c.l.b16 %v351
        %v403 = vunpack.c.h.b16 %v351
        %v404 = vunpack.c.l.b16 %v352
        %v405 = vunpack.c.h.b16 %v352
        %v406 = vunpack.c.l.b16 %v353
        %v407 = vunpack.c.h.b16 %v353
        %v408 = vunpack.c.l.b16 %v354
        %v409 = vunpack.c.h.b16 %v354
        %v410 = vunpack.c.l.b16 %v355
        %v411 = vunpack.c.h.b16 %v355
        %v412 = vunpack.c.l.b16 %v356
        %v413 = vunpack.c.h.b16 %v356
        %v414 = vunpack.c.l.b16 %v357
        %v415 = vunpack.c.h.b16 %v357
        %v416 = vunpack.c.l.b16 %v358
        %v417 = vunpack.c.h.b16 %v358
        %v418 = vunpack.c.l.b16 %v359
        %v419 = vunpack.c.h.b16 %v359
        %v420 = vunpack.c.l.b16 %v360
        %v421 = vunpack.c.h.b16 %v360
        %v422 = vunpack.c.l.b16 %v361
        %v423 = vunpack.c.h.b16 %v361
        %v424 = vunpack.c.l.b16 %v362
        %v425 = vunpack.c.h.b16 %v362
        %v426 = vunpack.c.l.b16 %v363
        %v427 = vunpack.c.h.b16 %v363
        %v428 = vunpack.c.l.b16 %v364
        %v429 = vunpack.c.h.b16 %v364
        %v430 = vunpack.c.l.b16 %v365
        %v431 = vunpack.c.h.b16 %v365
        %v432 = vpack.c.b16 %v402, %v400
        %v433 = vpack.c.b16 %v403, %v401
        %v434 = vpack.c.b16 %v406, %v404
        %v435 = vpack.c.b16 %v407, %v405
        %v436 = vpack.c.b16 %v410, %v408
        %v437 = vpack.c.b16 %v411, %v409
        %v438 = vpack.c.b16 %v414, %v412
        %v439 = vpack.c.b16 %v415, %v413
        %v440 = vpack.c.b16 %v418, %v416
        %v441 = vpack.c.b16 %v419, %v417
        %v442 = vpack.c.b16 %v422, %v420
        %v443 = vpack.c.b16 %v423, %v421
        %v444 = vpack.c.b16 %v426, %v424
        %v445 = vpack.c.b16 %v427, %v425
        %v446 = vpack.c.b16 %v430, %v428
        %v447 = vpack.c.b16 %v431, %v429
        %464 = vmatprep.subr.bf16.mxu0 %v433
        %465 = vmatpush1.bf16.msra.mxu0 %v432
        %466 = vmatprep.subr.bf16.mxu0 %v435
        %467 = vmatpush1.bf16.msra.mxu0 %v434
        %468 = vmatprep.subr.bf16.mxu0 %v437
        %469 = vmatpush1.bf16.msra.mxu0 %v436
        %470 = vmatprep.subr.bf16.mxu0 %v439
        %471 = vmatpush1.bf16.msra.mxu0 %v438
        %472 = vmatprep.subr.bf16.mxu0 %v441
        %473 = vmatpush1.bf16.msra.mxu0 %v440
        %474 = vmatprep.subr.bf16.mxu0 %v443
        %475 = vmatpush1.bf16.msra.mxu0 %v442
        %476 = vmatprep.subr.bf16.mxu0 %v445
        %477 = vmatpush1.bf16.msra.mxu0 %v444
        %478 = vmatprep.subr.bf16.mxu0 %v447
        %479 = vmatpush1.bf16.msra.mxu0 %v446
        %480 = vmatprep.subr.bf16.mxu0 0
        %481 = vmatpush1.bf16.msra.mxu0 0
        %482 = vmatprep.subr.bf16.mxu0 0
        %483 = vmatpush1.bf16.msra.mxu0 0
        %484 = vmatprep.subr.bf16.mxu0 0
        %485 = vmatpush1.bf16.msra.mxu0 0
        %486 = vmatprep.subr.bf16.mxu0 0
        %487 = vmatpush1.bf16.msra.mxu0 0
        %488 = vmatprep.subr.bf16.mxu0 0
        %489 = vmatpush1.bf16.msra.mxu0 0
        %490 = vmatprep.subr.bf16.mxu0 0
        %491 = vmatpush1.bf16.msra.mxu0 0
        %492 = vmatprep.subr.bf16.mxu0 0
        %493 = vmatpush1.bf16.msra.mxu0 0
        %494 = vmatprep.subr.bf16.mxu0 0
        %495 = vmatpush1.bf16.msra.mxu0 0
        %496 = vmatprep.mubr.bf16.mxu0 0
        %497 = vmatmul.mubr.bf16.gmra.mrb[0].mxu0 %v382
        %v498 = vpop.f32.mrb[0].mxu0
        %v499 = vadd.f32 %v371, %v498
        %v500 = vpop.f32.mrb[0].mxu0
        %v501 = vadd.f32 %v375, %v500
        %v502 = vpop.f32.mrb[0].mxu0
        %v503 = vadd.f32 %v371, %v502
        %v504 = vpop.f32.mrb[0].mxu0
        %v505 = vadd.f32 %v375, %v504
        %506 = vdwg.mxu0
        %v507 = vmax.f32 %v499, 0.0
        %v508 = vmax.f32 %v501, 0.0
        %v509 = vmax.f32 %v503, 0.0
        %v510 = vmax.f32 %v505, 0.0
        %v511 = vld [vmem:[%s339] sm:$0xff]
        %v512 = vld [vmem:[%s339 + $0x8] sm:$0xff]
        %v513 = vpack.c.bf16 %v509, %v507
        %v514 = vpack.c.bf16 %v510, %v508
        %v515 = vld [vmem:[%s281] sm:$0xf]
        %v516 = vld [vmem:[%s281 + $0x4] sm:$0xf]
        %v517 = vld [vmem:[%s281 + $0x8] sm:$0xf]
        %v518 = vld [vmem:[%s281 + $0xc] sm:$0xf]
        %v519 = vld [vmem:[%s281 + $0x10] sm:$0xf]
        %v520 = vld [vmem:[%s281 + $0x14] sm:$0xf]
        %v521 = vld [vmem:[%s281 + $0x18] sm:$0xf]
        %v522 = vld [vmem:[%s281 + $0x1c] sm:$0xf]
        %v523 = vld [vmem:[%s281 + $0x20] sm:$0xf]
        %v524 = vld [vmem:[%s281 + $0x24] sm:$0xf]
        %v525 = vld [vmem:[%s281 + $0x28] sm:$0xf]
        %v526 = vld [vmem:[%s281 + $0x2c] sm:$0xf]
        %v527 = vld [vmem:[%s281 + $0x30] sm:$0xf]
        %v528 = vld [vmem:[%s281 + $0x34] sm:$0xf]
        %v529 = vld [vmem:[%s281 + $0x38] sm:$0xf]
        %v530 = vld [vmem:[%s281 + $0x3c] sm:$0xf]
        %v531 = vld [vmem:[%s281 + $0x40] sm:$0xf]
        %v532 = vld [vmem:[%s281 + $0x44] sm:$0xf]
        %v533 = vld [vmem:[%s281 + $0x48] sm:$0xf]
        %v534 = vld [vmem:[%s281 + $0x4c] sm:$0xf]
        %v535 = vld [vmem:[%s281 + $0x50] sm:$0xf]
        %v536 = vld [vmem:[%s281 + $0x54] sm:$0xf]
        %v537 = vld [vmem:[%s281 + $0x58] sm:$0xf]
        %v538 = vld [vmem:[%s281 + $0x5c] sm:$0xf]
        %v539 = vld [vmem:[%s281 + $0x60] sm:$0xf]
        %v540 = vld [vmem:[%s281 + $0x64] sm:$0xf]
        %v541 = vld [vmem:[%s281 + $0x68] sm:$0xf]
        %v542 = vld [vmem:[%s281 + $0x6c] sm:$0xf]
        %v543 = vld [vmem:[%s281 + $0x70] sm:$0xf]
        %v544 = vld [vmem:[%s281 + $0x74] sm:$0xf]
        %v545 = vld [vmem:[%s281 + $0x78] sm:$0xf]
        %v546 = vld [vmem:[%s281 + $0x7c] sm:$0xf]
        %v579 = vunpack.c.l.b16 %v515
        %v580 = vunpack.c.l.b16 %v516
        %v581 = vunpack.c.l.b16 %v517
        %v582 = vunpack.c.l.b16 %v518
        %v583 = vunpack.c.l.b16 %v519
        %v584 = vunpack.c.l.b16 %v520
        %v585 = vunpack.c.l.b16 %v521
        %v586 = vunpack.c.l.b16 %v522
        %v587 = vunpack.c.l.b16 %v523
        %v588 = vunpack.c.l.b16 %v524
        %v589 = vunpack.c.l.b16 %v525
        %v590 = vunpack.c.l.b16 %v526
        %v591 = vunpack.c.l.b16 %v527
        %v592 = vunpack.c.l.b16 %v528
        %v593 = vunpack.c.l.b16 %v529
        %v594 = vunpack.c.l.b16 %v530
        %v595 = vunpack.c.l.b16 %v531
        %v596 = vunpack.c.l.b16 %v532
        %v597 = vunpack.c.l.b16 %v533
        %v598 = vunpack.c.l.b16 %v534
        %v599 = vunpack.c.l.b16 %v535
        %v600 = vunpack.c.l.b16 %v536
        %v601 = vunpack.c.l.b16 %v537
        %v602 = vunpack.c.l.b16 %v538
        %v603 = vunpack.c.l.b16 %v539
        %v604 = vunpack.c.l.b16 %v540
        %v605 = vunpack.c.l.b16 %v541
        %v606 = vunpack.c.l.b16 %v542
        %v607 = vunpack.c.l.b16 %v543
        %v608 = vunpack.c.l.b16 %v544
        %v609 = vunpack.c.l.b16 %v545
        %v610 = vunpack.c.l.b16 %v546
        %v611 = vpack.c.b16 %v580, %v579
        %v612 = vpack.c.b16 %v582, %v581
        %v613 = vpack.c.b16 %v584, %v583
        %v614 = vpack.c.b16 %v586, %v585
        %v615 = vpack.c.b16 %v588, %v587
        %v616 = vpack.c.b16 %v590, %v589
        %v617 = vpack.c.b16 %v592, %v591
        %v618 = vpack.c.b16 %v594, %v593
        %v619 = vpack.c.b16 %v596, %v595
        %v620 = vpack.c.b16 %v598, %v597
        %v621 = vpack.c.b16 %v600, %v599
        %v622 = vpack.c.b16 %v602, %v601
        %v623 = vpack.c.b16 %v604, %v603
        %v624 = vpack.c.b16 %v606, %v605
        %v625 = vpack.c.b16 %v608, %v607
        %v626 = vpack.c.b16 %v610, %v609
        %643 = vmatprep.subr.bf16.mxu0 0
        %644 = vmatpush1.bf16.msra.mxu0 %v611
        %645 = vmatprep.subr.bf16.mxu0 0
        %646 = vmatpush1.bf16.msra.mxu0 %v612
        %647 = vmatprep.subr.bf16.mxu0 0
        %648 = vmatpush1.bf16.msra.mxu0 %v613
        %649 = vmatprep.subr.bf16.mxu0 0
        %650 = vmatpush1.bf16.msra.mxu0 %v614
        %651 = vmatprep.subr.bf16.mxu0 0
        %652 = vmatpush1.bf16.msra.mxu0 %v615
        %653 = vmatprep.subr.bf16.mxu0 0
        %654 = vmatpush1.bf16.msra.mxu0 %v616
        %655 = vmatprep.subr.bf16.mxu0 0
        %656 = vmatpush1.bf16.msra.mxu0 %v617
        %657 = vmatprep.subr.bf16.mxu0 0
        %658 = vmatpush1.bf16.msra.mxu0 %v618
        %659 = vmatprep.subr.bf16.mxu0 0
        %660 = vmatpush1.bf16.msra.mxu0 %v619
        %661 = vmatprep.subr.bf16.mxu0 0
        %662 = vmatpush1.bf16.msra.mxu0 %v620
        %663 = vmatprep.subr.bf16.mxu0 0
        %664 = vmatpush1.bf16.msra.mxu0 %v621
        %665 = vmatprep.subr.bf16.mxu0 0
        %666 = vmatpush1.bf16.msra.mxu0 %v622
        %667 = vmatprep.subr.bf16.mxu0 0
        %668 = vmatpush1.bf16.msra.mxu0 %v623
        %669 = vmatprep.subr.bf16.mxu0 0
        %670 = vmatpush1.bf16.msra.mxu0 %v624
        %671 = vmatprep.subr.bf16.mxu0 0
        %672 = vmatpush1.bf16.msra.mxu0 %v625
        %673 = vmatprep.subr.bf16.mxu0 0
        %674 = vmatpush1.bf16.msra.mxu0 %v626
        %675 = vmatprep.mubr.bf16.mxu0 %v514
        %676 = vmatmul.mubr.bf16.gmra.mrb[0].mxu0 %v513
        %v677 = vpop.f32.mrb[0].mxu0
        %v678 = vadd.f32 0.0, %v677
        %v679 = vpop.f32.mrb[0].mxu0
        %v680 = vpop.f32.mrb[0].mxu0
        %v681 = vadd.f32 0.0, %v680
        %v682 = vpop.f32.mrb[0].mxu0
        %683 = vdwg.mxu0
        %v684 = vadd.f32 %v511, %v678
        %v685 = vadd.f32 %v512, %v681
        %686 = vst [vmem:[%s339] sm:$0xff] %v684
        %687 = vst [vmem:[%s339 + $0x8] sm:$0xff] %v685
        %p688 = scmp.eq.s32.totalorder %s27, 1
        // Predicated region
        $region53: #{feed_forward.1} parent=39 // pred_check
          %p689 = pneg %p688
        $region54: #{feed_forward.1} parent=39 // pred_check_branch
          %691 = sbr.rel (%p689) target = $region56
        $region55: #{feed_forward.1} parent=39 // pred_region
          %v692 = vld [vmem:[%s339] sm:$0xff]
          %v693 = vld [vmem:[%s339 + $0x8] sm:$0xff]
          %v694 = vld [vmem:[%s4] sm:$0x1]
          %v696 = vlaneseq
          %v697 = vshrl.u32 %v696, 7
          %v698 = vsub.s32 0, %v697
          %v699 = vrot.slane %v694, %v698
          %v701 = vadd.f32 %v692, %v699
          %v702 = vadd.f32 %v693, %v699
          %703 = vst [vmem:[%s339] sm:$0xff] %v701
          %704 = vst [vmem:[%s339 + $0x8] sm:$0xff] %v702
        $region56: #{feed_forward.1} parent=39 // pred_fallthru
          _
        %s705 = smul.u32 2, %s26
        %p706 = scmp.lt.s32.totalorder %s705, 1
        %s707 = scalar_select %p706, %s705, 1
        %s708 = smul.addr %s707, 8
        %s709 = scalar_lea.vmem %s5, %s708
        // Predicated region
        $region57: #{feed_forward.1} parent=39 // pred_check
          %p710 = pneg %p177
        $region58: #{feed_forward.1} parent=39 // pred_check_branch
          %712 = sbr.rel (%p710) target = $region60
        $region59: #{feed_forward.1} parent=39 // pred_region
          %s713 = smul.u32 2, %s26
        $region60: #{feed_forward.1} parent=39 // pred_fallthru
          _
        // Predicated region
        $region61: #{feed_forward.1} parent=39 // pred_check
          %p714 = pneg %p177
        $region62: #{feed_forward.1} parent=39 // pred_check_branch
          %716 = sbr.rel (%p714) target = $region64
        $region63: #{feed_forward.1} parent=39 // pred_region
          %s717 = smul.u32 2, %s26
          %p718 = scmp.lt.s32.totalorder %s717, 1
          %s719 = scalar_select %p718, %s717, 1
          %s720 = smul.addr %s719, 8
          %s721 = scalar_lea.vmem %s5, %s720
        $region64: #{feed_forward.1} parent=39 // pred_fallthru
          _
      $region40: #{feed_forward.1} parent=5 // pred_fallthru
        _
      %p722 = scmp.le.s32.totalorder 2, %s17
      // Predicated region
      $region65: #{feed_forward.1} parent=5 // pred_check
        %p723 = pneg %p722
      $region66: #{feed_forward.1} parent=5 // pred_check_branch
        %725 = sbr.rel (%p723) target = $region68
      $region67: #{feed_forward.1} parent=5 // pred_region
        %s726 = ssub.s32 %s17, 2
      $region68: #{feed_forward.1} parent=5 // pred_fallthru
        _
    $region6: #{feed_forward.1} parent=1 // loop_footer
      %s21 = sadd.s32 1, %s17
    $region7: #{feed_forward.1} parent=1 // loop_footer_branch
      %16 = sbr.rel target = $region3
    $region8: #{feed_forward.1} parent=1 // loop_exit
      _
    %727 = vsyncpa [#allocation3], 1
    %s728 = scalar_lea.sflag [#allocation3], 1
    %729 = vsyncpa %s728, 1
    %730 = vsyncpa [#allocation5], 1
    %s731 = scalar_lea.sflag [#allocation5], 1
    %732 = vsyncpa %s731, 1

</llo_original>
